<compile_context>
chip_gen: v7x
topology: tpu7x:2x2x1
jax: 0.10.0
libtpu: 0.0.40
codegen_flags: <defaults>
</compile_context>

<pallas_src>
import functools

import jax
import jax.numpy as jnp
from jax.experimental import pallas as pl
from jax.experimental.pallas import tpu as pltpu


# ----------------------------------------------------------------------------- kernel
def _gat_fused_kernel(x_full_ref, x_q_ref, adj_ref, w_ref, a_ref, o_ref, *,
                      nheads, fout, alpha, apply_elu, fast):
    """One multi-head GraphAttentionLayer for a (batch, query-row-tile) block.

    x_full_ref: (1, N, Fin)            all nodes (keys / values)
    x_q_ref:    (1, TQ, Fin)           query-row tile
    adj_ref:    (1, TQ, N) int8        adjacency rows for the query tile
    w_ref:      (Fin, nheads*fout)     per-head W concatenated along columns
    a_ref:      (2*nheads, fout)       rows (2h, 2h+1) = (a1, a2) of head h
    o_ref:      (1, TQ, nheads*fout)   concatenated head outputs
    """
    x_full = x_full_ref[0]
    x_q = x_q_ref[0]
    W = w_ref[...]
    A = a_ref[...]
    # int8 -> f32 once, then a plain f32 compare (cheap VPU convert, safe lowering).
    mask = adj_ref[0].astype(jnp.float32) > 0.0                       # (TQ, N)
    n_keys = mask.shape[-1]

    # h = x @ W for all heads at once (MXU), f32 accumulation.
    h_full = jnp.dot(x_full, W, preferred_element_type=jnp.float32)   # (N,  H*F)
    h_q = jnp.dot(x_q, W, preferred_element_type=jnp.float32)         # (TQ, H*F)

    neg = jnp.float32(-9e15)
    head_outs = []
    for hd in range(nheads):                       # static unroll, nheads is small
        hf = h_full[:, hd * fout:(hd + 1) * fout]                     # (N,  F)
        hq = h_q[:, hd * fout:(hd + 1) * fout]                        # (TQ, F)
        a1 = A[2 * hd:2 * hd + 1, :]                                  # (1, F)
        a2 = A[2 * hd + 1:2 * hd + 2, :]                              # (1, F)

        # e[i, j] = leakyrelu(h_i . a1 + h_j . a2)   (VPU mul + XLU row reduce)
        f1 = jnp.sum(hq * a1, axis=-1, keepdims=True)                 # (TQ, 1)
        f2 = jnp.sum(hf * a2, axis=-1, keepdims=True)                 # (N, 1)
        e = f1 + f2.T                                                 # (TQ, N)
        e = jnp.where(e > 0, e, alpha * e)                            # LeakyReLU(alpha)

        # Masked softmax over the key axis; numerator fused with the mask so the
        # -9e15-filled matrix is never materialized nor exp()'d.
        m = jnp.max(jnp.where(mask, e, neg), axis=-1, keepdims=True)  # (TQ, 1)
        p = jnp.where(mask, jnp.exp(e - m), 0.0)                      # (TQ, N)
        s = jnp.sum(p, axis=-1, keepdims=True)                        # (TQ, 1)
        # Rows with no neighbours: the torch -9e15 path degrades to uniform
        # attention over all nodes; reproduce that exactly.
        has_nbr = s > 0.0
        p = jnp.where(has_nbr, p, 1.0)
        s = jnp.where(has_nbr, s, jnp.float32(n_keys))
        attn = p * pl.reciprocal(s, approx=fast)   # EUP slot on the fast path

        if fast:
            # bf16 operands / f32 accumulation: 2x MXU throughput, halves VMEM
            # for the (TQ, N) attention matrix.  attn is in [0, 1].
            hp = jnp.dot(attn.astype(jnp.bfloat16), hf.astype(jnp.bfloat16),
                         preferred_element_type=jnp.float32)          # (TQ, F)
        else:
            hp = jnp.dot(attn, hf, preferred_element_type=jnp.float32)

        if apply_elu:
            hp = jnp.where(hp > 0, hp, jnp.exp(hp) - 1.0)             # ELU
        head_outs.append(hp)

    out = head_outs[0] if nheads == 1 else jnp.concatenate(head_outs, axis=-1)
    o_ref[0] = out.astype(o_ref.dtype)             # single lane-dense store


# ----------------------------------------------------------------------------- wrapper
def gat_multihead_layer(x, adj_i8, w_all, a_all, *, nheads, alpha,
                        apply_elu, fast=True, block_q=None):
    """All heads of one GraphAttentionLayer in a single pallas_call.

    Returns the per-head outputs concatenated along the feature axis:
    (B, N, nheads * fout).
    """
    B, N, Fin = x.shape
    fout_total = w_all.shape[1]
    assert fout_total % nheads == 0
    fout = fout_total // nheads
    assert a_all.shape == (2 * nheads, fout)

    # Query-row tiling: keeps adjacency / score temporaries at O(block_q * N).
    if block_q is None:
        block_q = N if N <= 512 else 512
    if N % block_q != 0 or (block_q != N and block_q % 8 != 0):
        block_q = N                                # fall back to untiled rows
    n_q = N // block_q

    # Explicit VMEM budget: double-buffered blocks + rough temporary footprint.
    block_bytes = 2 * (N * Fin * 4 + block_q * Fin * 4 + block_q * N * 1
                       + block_q * fout_total * 4)
    temp_bytes = (N * fout_total * 4 + block_q * fout_total * 4
                  + 4 * block_q * N * 4 + 2 * block_q * fout_total * 4)
    vmem_limit = int(min(112 * 2**20, max(32 * 2**20, 2 * (block_bytes + temp_bytes))))

    kernel = functools.partial(_gat_fused_kernel, nheads=nheads, fout=fout,
                               alpha=alpha, apply_elu=apply_elu, fast=fast)

    # TODO(synk): for genuinely sparse graphs at large N, add scalar-prefetched
    # per-row nonzero-column-tile lists (PrefetchScalarGridSpec) and skip empty
    # adjacency tiles with pl.when.
    return pl.pallas_call(
        kernel,
        out_shape=jax.ShapeDtypeStruct((B, N, fout_total), jnp.float32),
        grid=(B, n_q),
        in_specs=[
            pl.BlockSpec((1, N, Fin), lambda b, q: (b, 0, 0)),        # x, all nodes
            pl.BlockSpec((1, block_q, Fin), lambda b, q: (b, q, 0)),  # x, query rows
            pl.BlockSpec((1, block_q, N), lambda b, q: (b, q, 0)),    # adj rows (int8)
            pl.BlockSpec((Fin, fout_total), lambda b, q: (0, 0)),     # W (replicated)
            pl.BlockSpec((2 * nheads, fout), lambda b, q: (0, 0)),    # a (replicated)
        ],
        out_specs=pl.BlockSpec((1, block_q, fout_total), lambda b, q: (b, q, 0)),
        compiler_params=pltpu.CompilerParams(
            dimension_semantics=("parallel", "parallel"),
            vmem_limit_bytes=vmem_limit),
    )(x, x, adj_i8, w_all, a_all)


# ----------------------------------------------------------------------------- params
def xavier_uniform(key, shape, gain):
    fan_in, fan_out = shape[0], shape[1]
    bound = gain * jnp.sqrt(6.0 / (fan_in + fan_out))
    return jax.random.uniform(key, shape, jnp.float32, -bound, bound)


def pack_heads(head_params, fout):
    """[(W:(Fin,F), a:(2F,1))]  ->  W_all:(Fin, H*F), A_all:(2H, F)."""
    w_all = jnp.concatenate([W for (W, _) in head_params], axis=1)
    rows = []
    for (_, a) in head_params:
        rows.append(a[:fout, 0])
        rows.append(a[fout:, 0])
    a_all = jnp.stack(rows, axis=0)
    return w_all, a_all


def init_gat_params(key, nfeat, nhid, nclass, nheads):
    gain = 1.414
    keys = jax.random.split(key, 2 * nheads + 2)
    heads = []
    for h in range(nheads):
        W = xavier_uniform(keys[2 * h], (nfeat, nhid), gain)
        a = xavier_uniform(keys[2 * h + 1], (2 * nhid, 1), gain)
        heads.append((W, a))
    Wo = xavier_uniform(keys[-2], (nhid * nheads, nclass), gain)
    ao = xavier_uniform(keys[-1], (2 * nclass, 1), gain)
    return {
        "heads": heads, "out": (Wo, ao),
        "heads_packed": pack_heads(heads, nhid),
        "out_packed": pack_heads([(Wo, ao)], nclass),
        "nheads": nheads, "nhid": nhid, "nclass": nclass,
    }


# ----------------------------------------------------------------------------- forward
def gat_forward(x, adj, params, *, alpha, fast=True):
    """GAT.forward (nlayers=2, eval mode).

    Dropout is a no-op in eval mode (training=False), so it is omitted.
    """
    # TODO(synk): dropout paths only matter when training=True; eval forward is exact.
    adj_i8 = (adj > 0).astype(jnp.int8)            # 4x smaller adjacency DMA stream
    w1, a1 = params["heads_packed"]
    xh = gat_multihead_layer(x, adj_i8, w1, a1, nheads=params["nheads"],
                             alpha=alpha, apply_elu=True, fast=fast)
    wo, ao = params["out_packed"]
    out = gat_multihead_layer(xh, adj_i8, wo, ao, nheads=1,
                              alpha=alpha, apply_elu=True, fast=fast)
    assert out.shape == x.shape, "residual requires nclass == nfeat"
    return out + x                                  # residual


# ----------------------------------------------------------------------------- reference
def _gat_layer_ref(x, adj, W, a, *, alpha, apply_elu):
    h = jnp.einsum("bnf,fo->bno", x, W)
    F = W.shape[1]
    f1 = jnp.einsum("bno,o->bn", h, a[:F, 0])
    f2 = jnp.einsum("bno,o->bn", h, a[F:, 0])
    e = f1[:, :, None] + f2[:, None, :]
    e = jnp.where(e > 0, e, alpha * e)
    masked = jnp.where(adj > 0, e, -9e15)
    attn = jax.nn.softmax(masked, axis=-1)
    hp = jnp.einsum("bnm,bmo->bno", attn, h)
    if apply_elu:
        hp = jnp.where(hp > 0, hp, jnp.exp(hp) - 1.0)
    return hp


def gat_forward_ref(x, adj, params, *, alpha):
    inp = x
    xh = jnp.concatenate(
        [_gat_layer_ref(x, adj, W, a, alpha=alpha, apply_elu=True)
         for (W, a) in params["heads"]], axis=2)
    Wo, ao = params["out"]
    out = _gat_layer_ref(xh, adj, Wo, ao, alpha=alpha, apply_elu=True)
    return out + inp


# ----------------------------------------------------------------------------- main
if __name__ == "__main__":
    B, N = 2, 16
    nfeat, nhid, nclass, nheads = 8, 8, 8, 2   # nclass == nfeat so the residual is valid
    alpha = 0.2

    key = jax.random.PRNGKey(0)
    k_x, k_adj, k_p = jax.random.split(key, 3)

    x = jax.random.normal(k_x, (B, N, nfeat), jnp.float32)
    # random symmetric binary adjacency with self loops
    adj_rand = (jax.random.uniform(k_adj, (B, N, N)) > 0.5).astype(jnp.float32)
    adj = jnp.maximum(adj_rand, jnp.transpose(adj_rand, (0, 2, 1)))
    adj = jnp.maximum(adj, jnp.eye(N, dtype=jnp.float32)[None])

    params = init_gat_params(k_p, nfeat, nhid, nclass, nheads)

    ref = gat_forward_ref(x, adj, params, alpha=alpha)

    # precise path: f32 matmuls + exact reciprocal -> tight functional check.
    out_precise = jax.block_until_ready(gat_forward(x, adj, params, alpha=alpha, fast=False))
    assert out_precise.shape == (B, N, nclass), out_precise.shape
    err_p = float(jnp.max(jnp.abs(out_precise - ref)))
    assert jnp.allclose(out_precise, ref, atol=1e-4, rtol=1e-4), err_p

    # fast path (default): bf16 attn@h + approx reciprocal -> loose sanity check.
    out_fast = jax.block_until_ready(gat_forward(x, adj, params, alpha=alpha, fast=True))
    err_f = float(jnp.max(jnp.abs(out_fast - ref)))
    assert jnp.allclose(out_fast, ref, atol=1e-1, rtol=1e-1), err_f

    print("KERNEL_OK")
</pallas_src>

<mosaic_0001>
module attributes {stable_mosaic.version = 11 : i64} {
  func.func @_gat_fused_kernel(%arg0: i32, %arg1: i32, %arg2: memref<1x16x8xf32, #tpu.memory_space<vmem>>, %arg3: memref<1x16x8xf32, #tpu.memory_space<vmem>>, %arg4: memref<1x16x16xi8, #tpu.memory_space<vmem>>, %arg5: memref<8x16xf32, #tpu.memory_space<vmem>>, %arg6: memref<4x8xf32, #tpu.memory_space<vmem>>, %arg7: memref<1x16x16xf32, #tpu.memory_space<vmem>>) attributes {dimension_semantics = [#tpu.dimension_semantics<parallel>, #tpu.dimension_semantics<parallel>], iteration_bounds = array<i64: 2, 1>, scalar_prefetch = 0 : i64, scratch_operands = 0 : i64, tpu.core_type = #tpu.core_type<tc>, window_params = [{transform_indices = @transform_0, window_bounds = array<i64: 1, 16, 8>}, {transform_indices = @transform_1, window_bounds = array<i64: 1, 16, 8>}, {transform_indices = @transform_2, window_bounds = array<i64: 1, 16, 16>}, {pipeline_mode = #tpu.pipeline_mode<synchronous>, transform_indices = @transform_3, window_bounds = array<i64: 8, 16>}, {pipeline_mode = #tpu.pipeline_mode<synchronous>, transform_indices = @transform_4, window_bounds = array<i64: 4, 8>}, {transform_indices = @transform_5, window_bounds = array<i64: 1, 16, 16>}]} {
    %c0 = arith.constant 0 : index
    %c0_0 = arith.constant 0 : index
    %c0_1 = arith.constant 0 : index
    %0 = vector.load %arg2[%c0, %c0_0, %c0_1] : memref<1x16x8xf32, #tpu.memory_space<vmem>>, vector<1x16x8xf32>
    %1 = vector.shape_cast %0 : vector<1x16x8xf32> to vector<16x8xf32>
    %c0_2 = arith.constant 0 : index
    %c0_3 = arith.constant 0 : index
    %c0_4 = arith.constant 0 : index
    %2 = vector.load %arg3[%c0_2, %c0_3, %c0_4] : memref<1x16x8xf32, #tpu.memory_space<vmem>>, vector<1x16x8xf32>
    %3 = vector.shape_cast %2 : vector<1x16x8xf32> to vector<16x8xf32>
    %c0_5 = arith.constant 0 : index
    %c0_6 = arith.constant 0 : index
    %4 = vector.load %arg5[%c0_5, %c0_6] : memref<8x16xf32, #tpu.memory_space<vmem>>, vector<8x16xf32>
    %c0_7 = arith.constant 0 : index
    %c0_8 = arith.constant 0 : index
    %5 = vector.load %arg6[%c0_7, %c0_8] : memref<4x8xf32, #tpu.memory_space<vmem>>, vector<4x8xf32>
    %c0_9 = arith.constant 0 : index
    %c0_10 = arith.constant 0 : index
    %c0_11 = arith.constant 0 : index
    %6 = vector.load %arg4[%c0_9, %c0_10, %c0_11] : memref<1x16x16xi8, #tpu.memory_space<vmem>>, vector<1x16x16xi8>
    %7 = vector.shape_cast %6 : vector<1x16x16xi8> to vector<16x16xi8>
    %8 = arith.sitofp %7 : vector<16x16xi8> to vector<16x16xf32>
    %cst = arith.constant 0.000000e+00 : f32
    %9 = vector.broadcast %cst : f32 to vector<16x16xf32>
    %10 = arith.cmpf ogt, %8, %9 : vector<16x16xf32>
    %cst_12 = arith.constant dense<0.000000e+00> : vector<16x16xf32>
    %11 = tpu.matmul %1, %4, %cst_12 {dimension_numbers = #tpu.dot_dimension_numbers<[1], [0], [0], [1], [0, 0, 1, 1], [], []>} : vector<16x8xf32>, vector<8x16xf32>, vector<16x16xf32> -> vector<16x16xf32>
    %cst_13 = arith.constant dense<0.000000e+00> : vector<16x16xf32>
    %12 = tpu.matmul %3, %4, %cst_13 {dimension_numbers = #tpu.dot_dimension_numbers<[1], [0], [0], [1], [0, 0, 1, 1], [], []>} : vector<16x8xf32>, vector<8x16xf32>, vector<16x16xf32> -> vector<16x16xf32>
    %13 = vector.extract_strided_slice %11 {offsets = [0, 0], sizes = [16, 8], strides = [1, 1]} : vector<16x16xf32> to vector<16x8xf32>
    %14 = vector.extract_strided_slice %12 {offsets = [0, 0], sizes = [16, 8], strides = [1, 1]} : vector<16x16xf32> to vector<16x8xf32>
    %15 = vector.extract_strided_slice %5 {offsets = [0, 0], sizes = [1, 8], strides = [1, 1]} : vector<4x8xf32> to vector<1x8xf32>
    %16 = vector.extract_strided_slice %5 {offsets = [1, 0], sizes = [1, 8], strides = [1, 1]} : vector<4x8xf32> to vector<1x8xf32>
    %17 = vector.broadcast %15 : vector<1x8xf32> to vector<16x8xf32>
    %18 = arith.mulf %14, %17 : vector<16x8xf32>
    %cst_14 = arith.constant dense<0.000000e+00> : vector<16xf32>
    %19 = vector.multi_reduction <add>, %18, %cst_14 [1] : vector<16x8xf32> to vector<16xf32>
    %20 = vector.shape_cast %19 : vector<16xf32> to vector<16x1xf32>
    %21 = vector.broadcast %16 : vector<1x8xf32> to vector<16x8xf32>
    %22 = arith.mulf %13, %21 : vector<16x8xf32>
    %cst_15 = arith.constant dense<0.000000e+00> : vector<16xf32>
    %23 = vector.multi_reduction <add>, %22, %cst_15 [1] : vector<16x8xf32> to vector<16xf32>
    %24 = vector.shape_cast %23 : vector<16xf32> to vector<16x1xf32>
    %25 = tpu.transpose %24, [1, 0] : vector<16x1xf32> -> vector<1x16xf32>
    %26 = vector.broadcast %20 : vector<16x1xf32> to vector<16x16xf32>
    %27 = vector.broadcast %25 : vector<1x16xf32> to vector<16x16xf32>
    %28 = arith.addf %26, %27 : vector<16x16xf32>
    %cst_16 = arith.constant 0.000000e+00 : f32
    %29 = vector.broadcast %cst_16 : f32 to vector<16x16xf32>
    %30 = arith.cmpf ogt, %28, %29 : vector<16x16xf32>
    %cst_17 = arith.constant 2.000000e-01 : f32
    %31 = vector.broadcast %cst_17 : f32 to vector<16x16xf32>
    %32 = arith.mulf %31, %28 : vector<16x16xf32>
    %33 = arith.select %30, %28, %32 : vector<16x16xi1>, vector<16x16xf32>
    %cst_18 = arith.constant -9.000000e+15 : f32
    %34 = vector.broadcast %cst_18 : f32 to vector<16x16xf32>
    %35 = arith.select %10, %33, %34 : vector<16x16xi1>, vector<16x16xf32>
    %cst_19 = arith.constant dense<0xFF800000> : vector<16xf32>
    %36 = vector.multi_reduction <maximumf>, %35, %cst_19 [1] : vector<16x16xf32> to vector<16xf32>
    %37 = vector.shape_cast %36 : vector<16xf32> to vector<16x1xf32>
    %38 = vector.broadcast %37 : vector<16x1xf32> to vector<16x16xf32>
    %39 = arith.subf %33, %38 : vector<16x16xf32>
    %40 = math.exp %39 : vector<16x16xf32>
    %cst_20 = arith.constant 0.000000e+00 : f32
    %41 = vector.broadcast %cst_20 : f32 to vector<16x16xf32>
    %42 = arith.select %10, %40, %41 : vector<16x16xi1>, vector<16x16xf32>
    %cst_21 = arith.constant dense<0.000000e+00> : vector<16xf32>
    %43 = vector.multi_reduction <add>, %42, %cst_21 [1] : vector<16x16xf32> to vector<16xf32>
    %44 = vector.shape_cast %43 : vector<16xf32> to vector<16x1xf32>
    %cst_22 = arith.constant 0.000000e+00 : f32
    %45 = vector.broadcast %cst_22 : f32 to vector<16x1xf32>
    %46 = arith.cmpf ogt, %44, %45 : vector<16x1xf32>
    %cst_23 = arith.constant 1.000000e+00 : f32
    %47 = vector.shape_cast %46 : vector<16x1xi1> to vector<16x1xi1>
    %48 = vector.broadcast %47 : vector<16x1xi1> to vector<16x16xi1>
    %49 = vector.broadcast %cst_23 : f32 to vector<16x16xf32>
    %50 = arith.select %48, %42, %49 : vector<16x16xi1>, vector<16x16xf32>
    %cst_24 = arith.constant 1.600000e+01 : f32
    %51 = vector.broadcast %cst_24 : f32 to vector<16x1xf32>
    %52 = arith.select %46, %44, %51 : vector<16x1xi1>, vector<16x1xf32>
    %53 = tpu.reciprocal %52 : vector<16x1xf32> -> vector<16x1xf32>
    %54 = vector.broadcast %53 : vector<16x1xf32> to vector<16x16xf32>
    %55 = arith.mulf %50, %54 : vector<16x16xf32>
    %cst_25 = arith.constant dense<0.000000e+00> : vector<16x8xf32>
    %56 = tpu.matmul %55, %13, %cst_25 {dimension_numbers = #tpu.dot_dimension_numbers<[1], [0], [0], [1], [0, 0, 1, 1], [], []>} : vector<16x16xf32>, vector<16x8xf32>, vector<16x8xf32> -> vector<16x8xf32>
    %cst_26 = arith.constant 0.000000e+00 : f32
    %57 = vector.broadcast %cst_26 : f32 to vector<16x8xf32>
    %58 = arith.cmpf ogt, %56, %57 : vector<16x8xf32>
    %59 = math.exp %56 : vector<16x8xf32>
    %cst_27 = arith.constant 1.000000e+00 : f32
    %60 = vector.broadcast %cst_27 : f32 to vector<16x8xf32>
    %61 = arith.subf %59, %60 : vector<16x8xf32>
    %62 = arith.select %58, %56, %61 : vector<16x8xi1>, vector<16x8xf32>
    %63 = vector.extract_strided_slice %11 {offsets = [0, 8], sizes = [16, 8], strides = [1, 1]} : vector<16x16xf32> to vector<16x8xf32>
    %64 = vector.extract_strided_slice %12 {offsets = [0, 8], sizes = [16, 8], strides = [1, 1]} : vector<16x16xf32> to vector<16x8xf32>
    %65 = vector.extract_strided_slice %5 {offsets = [2, 0], sizes = [1, 8], strides = [1, 1]} : vector<4x8xf32> to vector<1x8xf32>
    %66 = vector.extract_strided_slice %5 {offsets = [3, 0], sizes = [1, 8], strides = [1, 1]} : vector<4x8xf32> to vector<1x8xf32>
    %67 = vector.broadcast %65 : vector<1x8xf32> to vector<16x8xf32>
    %68 = arith.mulf %64, %67 : vector<16x8xf32>
    %cst_28 = arith.constant dense<0.000000e+00> : vector<16xf32>
    %69 = vector.multi_reduction <add>, %68, %cst_28 [1] : vector<16x8xf32> to vector<16xf32>
    %70 = vector.shape_cast %69 : vector<16xf32> to vector<16x1xf32>
    %71 = vector.broadcast %66 : vector<1x8xf32> to vector<16x8xf32>
    %72 = arith.mulf %63, %71 : vector<16x8xf32>
    %cst_29 = arith.constant dense<0.000000e+00> : vector<16xf32>
    %73 = vector.multi_reduction <add>, %72, %cst_29 [1] : vector<16x8xf32> to vector<16xf32>
    %74 = vector.shape_cast %73 : vector<16xf32> to vector<16x1xf32>
    %75 = tpu.transpose %74, [1, 0] : vector<16x1xf32> -> vector<1x16xf32>
    %76 = vector.broadcast %70 : vector<16x1xf32> to vector<16x16xf32>
    %77 = vector.broadcast %75 : vector<1x16xf32> to vector<16x16xf32>
    %78 = arith.addf %76, %77 : vector<16x16xf32>
    %cst_30 = arith.constant 0.000000e+00 : f32
    %79 = vector.broadcast %cst_30 : f32 to vector<16x16xf32>
    %80 = arith.cmpf ogt, %78, %79 : vector<16x16xf32>
    %cst_31 = arith.constant 2.000000e-01 : f32
    %81 = vector.broadcast %cst_31 : f32 to vector<16x16xf32>
    %82 = arith.mulf %81, %78 : vector<16x16xf32>
    %83 = arith.select %80, %78, %82 : vector<16x16xi1>, vector<16x16xf32>
    %cst_32 = arith.constant -9.000000e+15 : f32
    %84 = vector.broadcast %cst_32 : f32 to vector<16x16xf32>
    %85 = arith.select %10, %83, %84 : vector<16x16xi1>, vector<16x16xf32>
    %cst_33 = arith.constant dense<0xFF800000> : vector<16xf32>
    %86 = vector.multi_reduction <maximumf>, %85, %cst_33 [1] : vector<16x16xf32> to vector<16xf32>
    %87 = vector.shape_cast %86 : vector<16xf32> to vector<16x1xf32>
    %88 = vector.broadcast %87 : vector<16x1xf32> to vector<16x16xf32>
    %89 = arith.subf %83, %88 : vector<16x16xf32>
    %90 = math.exp %89 : vector<16x16xf32>
    %cst_34 = arith.constant 0.000000e+00 : f32
    %91 = vector.broadcast %cst_34 : f32 to vector<16x16xf32>
    %92 = arith.select %10, %90, %91 : vector<16x16xi1>, vector<16x16xf32>
    %cst_35 = arith.constant dense<0.000000e+00> : vector<16xf32>
    %93 = vector.multi_reduction <add>, %92, %cst_35 [1] : vector<16x16xf32> to vector<16xf32>
    %94 = vector.shape_cast %93 : vector<16xf32> to vector<16x1xf32>
    %cst_36 = arith.constant 0.000000e+00 : f32
    %95 = vector.broadcast %cst_36 : f32 to vector<16x1xf32>
    %96 = arith.cmpf ogt, %94, %95 : vector<16x1xf32>
    %cst_37 = arith.constant 1.000000e+00 : f32
    %97 = vector.shape_cast %96 : vector<16x1xi1> to vector<16x1xi1>
    %98 = vector.broadcast %97 : vector<16x1xi1> to vector<16x16xi1>
    %99 = vector.broadcast %cst_37 : f32 to vector<16x16xf32>
    %100 = arith.select %98, %92, %99 : vector<16x16xi1>, vector<16x16xf32>
    %cst_38 = arith.constant 1.600000e+01 : f32
    %101 = vector.broadcast %cst_38 : f32 to vector<16x1xf32>
    %102 = arith.select %96, %94, %101 : vector<16x1xi1>, vector<16x1xf32>
    %103 = tpu.reciprocal %102 : vector<16x1xf32> -> vector<16x1xf32>
    %104 = vector.broadcast %103 : vector<16x1xf32> to vector<16x16xf32>
    %105 = arith.mulf %100, %104 : vector<16x16xf32>
    %cst_39 = arith.constant dense<0.000000e+00> : vector<16x8xf32>
    %106 = tpu.matmul %105, %63, %cst_39 {dimension_numbers = #tpu.dot_dimension_numbers<[1], [0], [0], [1], [0, 0, 1, 1], [], []>} : vector<16x16xf32>, vector<16x8xf32>, vector<16x8xf32> -> vector<16x8xf32>
    %cst_40 = arith.constant 0.000000e+00 : f32
    %107 = vector.broadcast %cst_40 : f32 to vector<16x8xf32>
    %108 = arith.cmpf ogt, %106, %107 : vector<16x8xf32>
    %109 = math.exp %106 : vector<16x8xf32>
    %cst_41 = arith.constant 1.000000e+00 : f32
    %110 = vector.broadcast %cst_41 : f32 to vector<16x8xf32>
    %111 = arith.subf %109, %110 : vector<16x8xf32>
    %112 = arith.select %108, %106, %111 : vector<16x8xi1>, vector<16x8xf32>
    %113 = tpu.concatenate %62, %112 in 1 : vector<16x8xf32>, vector<16x8xf32> -> vector<16x16xf32>
    %c0_42 = arith.constant 0 : index
    %c0_43 = arith.constant 0 : index
    %c0_44 = arith.constant 0 : index
    %114 = vector.load %arg7[%c0_42, %c0_43, %c0_44] : memref<1x16x16xf32, #tpu.memory_space<vmem>>, vector<1x16x16xf32>
    %115 = vector.shape_cast %114 : vector<1x16x16xf32> to vector<16x16xf32>
    %116 = vector.shape_cast %113 : vector<16x16xf32> to vector<1x16x16xf32>
    tpu.vector_store %arg7[%c0_42, %c0_43, %c0_44], %116 {strides = array<i32>} : memref<1x16x16xf32, #tpu.memory_space<vmem>>, vector<1x16x16xf32>,
    return
  }
  func.func @transform_0(%arg0: i32, %arg1: i32) -> (i32, i32, i32) {
    %c0_i32 = arith.constant 0 : i32
    %c0_i32_0 = arith.constant 0 : i32
    %c0_i32_1 = arith.constant 0 : i32
    return %arg0, %c0_i32, %c0_i32_0 : i32, i32, i32
  }
  func.func @transform_1(%arg0: i32, %arg1: i32) -> (i32, i32, i32) {
    %c0_i32 = arith.constant 0 : i32
    %c0_i32_0 = arith.constant 0 : i32
    return %arg0, %arg1, %c0_i32 : i32, i32, i32
  }
  func.func @transform_2(%arg0: i32, %arg1: i32) -> (i32, i32, i32) {
    %c0_i32 = arith.constant 0 : i32
    %c0_i32_0 = arith.constant 0 : i32
    return %arg0, %arg1, %c0_i32 : i32, i32, i32
  }
  func.func @transform_3(%arg0: i32, %arg1: i32) -> (i32, i32) {
    %c0_i32 = arith.constant 0 : i32
    %c0_i32_0 = arith.constant 0 : i32
    %c0_i32_1 = arith.constant 0 : i32
    return %c0_i32, %c0_i32_0 : i32, i32
  }
  func.func @transform_4(%arg0: i32, %arg1: i32) -> (i32, i32) {
    %c0_i32 = arith.constant 0 : i32
    %c0_i32_0 = arith.constant 0 : i32
    %c0_i32_1 = arith.constant 0 : i32
    return %c0_i32, %c0_i32_0 : i32, i32
  }
  func.func @transform_5(%arg0: i32, %arg1: i32) -> (i32, i32, i32) {
    %c0_i32 = arith.constant 0 : i32
    %c0_i32_0 = arith.constant 0 : i32
    return %arg0, %arg1, %c0_i32 : i32, i32, i32
  }
}

</mosaic_0001>

<llo_original>
// kernel: tpu_custom_call.1
$region0: #{tpu_custom_call.1}
  #allocation0 [shape = 'u32[]', space=smem, size = 0x4, offset = 0x4, fixed_abs, tag = 'smem constant byte address 0x4 - core index']
  #allocation1 [shape = 'u32[144,128]{1,0:T(1,128)}', space=vmem, size = 0x12000, scoped, tag = 'internal scratch']
  %s0 = inlined_call_operand.vmem [shape: f32[2,16,8], index: 0, kind: input, shape index: {}]
  %s1 = inlined_call_operand.vmem [shape: f32[2,16,8], index: 1, kind: input, shape index: {}]
  %s2 = inlined_call_operand.vmem [shape: s8[2,16,16], index: 2, kind: input, shape index: {}]
  %s3 = inlined_call_operand.vmem [shape: f32[8,16], index: 3, kind: input, shape index: {}]
  %s4 = inlined_call_operand.vmem [shape: f32[4,8], index: 4, kind: input, shape index: {}]
  %s5 = inlined_call_operand.hbm [shape: f32[2,16,16], index: 5, kind: output, shape index: {}]
  %s6 = sld [smem:[#allocation0]]
  $region53: #{tpu_custom_call.1} parent=0
    _
  %s8 = ssub.s32 1, %s6
  %s9 = scalar_select 0, %s8, %s6
  $region1: #{tpu_custom_call.1} parent=0
    #allocation2 [shape = 'u8[16384]{0}', space=vmem, size = 0x4000, scoped, tag = 'output window, operand 0']
    #allocation3 [shape = 's32[2]{0}', space=sflag, size = 0x8, scoped, tag = 'scoped memory for tpu_custom_call.1']
    %10 = vsyncpa [#allocation3], 0
    %s11 = scalar_lea.sflag [#allocation3], 1
    %12 = vsyncpa %s11, 0
    loop: start=0, step=1, limit=4
    $region2: #{tpu_custom_call.1} parent=1 // loop_pre_header
      _
    $region3: #{tpu_custom_call.1} parent=1 // loop_header
      %s14 = sphi 0, %s18
      %p15 = scmp.ge.s32.totalorder %s14, 4
      %s21 = sphi 0, %s33
      %s22 = sphi 0, %s29
      %s23 = sphi 0, %s21
      %s24 = sphi 0, %s22
      %s25 = sphi 0, %s23
      %s26 = sphi 0, %s24
      %s36 = sphi 0, %s38
      %s39 = sphi 0, %s36
      %s40 = sphi 0, %s39
      %s56 = sphi 0, %s40
      %s64 = sphi 0, %s66
      %s67 = sphi 0, %s64
      %s68 = sphi 0, %s67
      %s84 = sphi 0, %s68
      %s92 = sphi 0, %s94
      %s95 = sphi 0, %s92
      %s96 = sphi 0, %s95
      %s112 = sphi 0, %s96
      %s116 = sphi 0, %s116
      %s118 = sphi 0, %s116
      %s119 = sphi 0, %s118
      %s133 = sphi 0, %s119
      %s137 = sphi 0, %s137
      %s139 = sphi 0, %s137
      %s140 = sphi 0, %s139
      %s154 = sphi 0, %s140
      %s162 = sphi 0, %s164
      %s165 = sphi 0, %s162
      %s166 = sphi 0, %s165
      %s182 = sphi 0, %s166
    $region4: #{tpu_custom_call.1} parent=1 // loop_header_branch
      %17 = sbr.rel (%p15) target = $region8
    $region5: #{tpu_custom_call.1} parent=1 // loop_body
      %s19 = ssub.s32 %s14, 1
      %s20 = ssub.s32 %s14, 2
      %s27 = sadd.s32 1, %s22
      %p28 = scmp.ge.s32.totalorder %s27, 1
      %s29 = scalar_select %p28, 0, %s27
      %s30 = sadd.s32 1, %s21
      %s31 = scalar_select %p28, %s30, %s21
      %p32 = scmp.ge.s32.totalorder %s31, 2
      %s33 = scalar_select %p32, 0, %s31
      %s34 = ssub.s32 %s21, %s33
      %p35 = scmp.eq.s32.totalorder %s34, 0
      %s37 = sadd.s32 %s36, 1
      %s38 = scalar_select %p35, %s36, %s37
      %p41 = pneg %p35
      %p42 = scmp.eq.s32.totalorder %s14, 1
      %p43 = por %p41, %p42
      %p44 = scmp.ne.s32.totalorder %s36, %s39
      %p45 = scmp.eq.s32.totalorder %s14, 0
      %p46 = por %p44, %p45
      %p47 = scmp.ne.s32.totalorder %s36, %s39
      %p48 = scmp.eq.s32.totalorder %s19, 1
      %p49 = por %p47, %p48
      %p50 = scmp.ne.s32.totalorder %s39, %s40
      %p51 = scmp.eq.s32.totalorder %s19, 0
      %p52 = por %p50, %p51
      %p53 = scmp.ne.s32.totalorder %s39, %s40
      %p54 = scmp.eq.s32.totalorder %s20, 1
      %p55 = por %p53, %p54
      %p57 = scmp.ne.s32.totalorder %s40, %s56
      %p58 = scmp.eq.s32.totalorder %s20, 0
      %p59 = por %p57, %p58
      %s60 = ssub.s32 %s21, %s33
      %s61 = ssub.s32 %s22, %s29
      %s62 = sor.u32 %s60, %s61
      %p63 = scmp.eq.s32.totalorder %s62, 0
      %s65 = sadd.s32 %s64, 1
      %s66 = scalar_select %p63, %s64, %s65
      %p69 = pneg %p63
      %p70 = scmp.eq.s32.totalorder %s14, 1
      %p71 = por %p69, %p70
      %p72 = scmp.ne.s32.totalorder %s64, %s67
      %p73 = scmp.eq.s32.totalorder %s14, 0
      %p74 = por %p72, %p73
      %p75 = scmp.ne.s32.totalorder %s64, %s67
      %p76 = scmp.eq.s32.totalorder %s19, 1
      %p77 = por %p75, %p76
      %p78 = scmp.ne.s32.totalorder %s67, %s68
      %p79 = scmp.eq.s32.totalorder %s19, 0
      %p80 = por %p78, %p79
      %p81 = scmp.ne.s32.totalorder %s67, %s68
      %p82 = scmp.eq.s32.totalorder %s20, 1
      %p83 = por %p81, %p82
      %p85 = scmp.ne.s32.totalorder %s68, %s84
      %p86 = scmp.eq.s32.totalorder %s20, 0
      %p87 = por %p85, %p86
      %s88 = ssub.s32 %s21, %s33
      %s89 = ssub.s32 %s22, %s29
      %s90 = sor.u32 %s88, %s89
      %p91 = scmp.eq.s32.totalorder %s90, 0
      %s93 = sadd.s32 %s92, 1
      %s94 = scalar_select %p91, %s92, %s93
      %p97 = pneg %p91
      %p98 = scmp.eq.s32.totalorder %s14, 1
      %p99 = por %p97, %p98
      %p100 = scmp.ne.s32.totalorder %s92, %s95
      %p101 = scmp.eq.s32.totalorder %s14, 0
      %p102 = por %p100, %p101
      %p103 = scmp.ne.s32.totalorder %s92, %s95
      %p104 = scmp.eq.s32.totalorder %s19, 1
      %p105 = por %p103, %p104
      %p106 = scmp.ne.s32.totalorder %s95, %s96
      %p107 = scmp.eq.s32.totalorder %s19, 0
      %p108 = por %p106, %p107
      %p109 = scmp.ne.s32.totalorder %s95, %s96
      %p110 = scmp.eq.s32.totalorder %s20, 1
      %p111 = por %p109, %p110
      %p113 = scmp.ne.s32.totalorder %s96, %s112
      %p114 = scmp.eq.s32.totalorder %s20, 0
      %p115 = por %p113, %p114
      %s117 = sadd.s32 %s116, 1
      %p120 = scmp.eq.s32.totalorder %s14, 1
      %p121 = scmp.ne.s32.totalorder %s116, %s118
      %p122 = scmp.eq.s32.totalorder %s14, 0
      %p123 = por %p121, %p122
      %p124 = scmp.ne.s32.totalorder %s116, %s118
      %p125 = scmp.eq.s32.totalorder %s19, 1
      %p126 = por %p124, %p125
      %p127 = scmp.ne.s32.totalorder %s118, %s119
      %p128 = scmp.eq.s32.totalorder %s19, 0
      %p129 = por %p127, %p128
      %p130 = scmp.ne.s32.totalorder %s118, %s119
      %p131 = scmp.eq.s32.totalorder %s20, 1
      %p132 = por %p130, %p131
      %p134 = scmp.ne.s32.totalorder %s119, %s133
      %p135 = scmp.eq.s32.totalorder %s20, 0
      %p136 = por %p134, %p135
      %s138 = sadd.s32 %s137, 1
      %p141 = scmp.eq.s32.totalorder %s14, 1
      %p142 = scmp.ne.s32.totalorder %s137, %s139
      %p143 = scmp.eq.s32.totalorder %s14, 0
      %p144 = por %p142, %p143
      %p145 = scmp.ne.s32.totalorder %s137, %s139
      %p146 = scmp.eq.s32.totalorder %s19, 1
      %p147 = por %p145, %p146
      %p148 = scmp.ne.s32.totalorder %s139, %s140
      %p149 = scmp.eq.s32.totalorder %s19, 0
      %p150 = por %p148, %p149
      %p151 = scmp.ne.s32.totalorder %s139, %s140
      %p152 = scmp.eq.s32.totalorder %s20, 1
      %p153 = por %p151, %p152
      %p155 = scmp.ne.s32.totalorder %s140, %s154
      %p156 = scmp.eq.s32.totalorder %s20, 0
      %p157 = por %p155, %p156
      %s158 = ssub.s32 %s21, %s33
      %s159 = ssub.s32 %s22, %s29
      %s160 = sor.u32 %s158, %s159
      %p161 = scmp.eq.s32.totalorder %s160, 0
      %s163 = sadd.s32 %s162, 1
      %s164 = scalar_select %p161, %s162, %s163
      %p167 = pneg %p161
      %p168 = scmp.eq.s32.totalorder %s14, 1
      %p169 = por %p167, %p168
      %p170 = scmp.ne.s32.totalorder %s162, %s165
      %p171 = scmp.eq.s32.totalorder %s14, 0
      %p172 = por %p170, %p171
      %p173 = scmp.ne.s32.totalorder %s162, %s165
      %p174 = scmp.eq.s32.totalorder %s19, 1
      %p175 = por %p173, %p174
      %p176 = scmp.ne.s32.totalorder %s165, %s166
      %p177 = scmp.eq.s32.totalorder %s19, 0
      %p178 = por %p176, %p177
      %p179 = scmp.ne.s32.totalorder %s165, %s166
      %p180 = scmp.eq.s32.totalorder %s20, 1
      %p181 = por %p179, %p180
      %p183 = scmp.ne.s32.totalorder %s166, %s182
      %p184 = scmp.eq.s32.totalorder %s20, 0
      %p185 = por %p183, %p184
      %p186 = scmp.le.s32.totalorder 1, %s14
      %p187 = scmp.lt.s32.totalorder %s14, 3
      %p188 = pnand %p186, %p187
      %p189 = pneg %p188
      // Predicated region
      $region9: #{tpu_custom_call.1} parent=5 // pred_check
        _
      $region10: #{tpu_custom_call.1} parent=5 // pred_check_branch
        %191 = sbr.rel (%p188) target = $region12
      $region11: #{tpu_custom_call.1} parent=5 // pred_region
        %s192 = ssub.s32 %s14, 1
        // Predicated region
        $region13: #{tpu_custom_call.1} parent=11 // pred_check
          %p193 = pneg %p129
        $region14: #{tpu_custom_call.1} parent=11 // pred_check_branch
          %195 = sbr.rel (%p193) target = $region16
        $region15: #{tpu_custom_call.1} parent=11 // pred_region
          _
        $region16: #{tpu_custom_call.1} parent=11 // pred_fallthru
          _
        // Predicated region
        $region17: #{tpu_custom_call.1} parent=11 // pred_check
          %p196 = pneg %p150
        $region18: #{tpu_custom_call.1} parent=11 // pred_check_branch
          %198 = sbr.rel (%p196) target = $region20
        $region19: #{tpu_custom_call.1} parent=11 // pred_region
          _
        $region20: #{tpu_custom_call.1} parent=11 // pred_fallthru
          _
      $region12: #{tpu_custom_call.1} parent=5 // pred_fallthru
        _
      %p199 = scmp.lt.s32.totalorder %s14, 2
      // Predicated region
      $region21: #{tpu_custom_call.1} parent=5 // pred_check
        %p200 = pneg %p199
      $region22: #{tpu_custom_call.1} parent=5 // pred_check_branch
        %202 = sbr.rel (%p200) target = $region24
      $region23: #{tpu_custom_call.1} parent=5 // pred_region
        // Predicated region
        $region25: #{tpu_custom_call.1} parent=23 // pred_check
          %p203 = pneg %p46
        $region26: #{tpu_custom_call.1} parent=23 // pred_check_branch
          %205 = sbr.rel (%p203) target = $region28
        $region27: #{tpu_custom_call.1} parent=23 // pred_region
          %p206 = scmp.lt.s32.totalorder %s21, 1
          %s207 = scalar_select %p206, %s21, 1
          %s208 = smul.addr %s207, 2
          %s209 = smul.addr %s208, 8
          %s210 = scalar_lea.vmem %s0, %s209
        $region28: #{tpu_custom_call.1} parent=23 // pred_fallthru
          _
        // Predicated region
        $region29: #{tpu_custom_call.1} parent=23 // pred_check
          %p211 = pneg %p74
        $region30: #{tpu_custom_call.1} parent=23 // pred_check_branch
          %213 = sbr.rel (%p211) target = $region32
        $region31: #{tpu_custom_call.1} parent=23 // pred_region
          %s214 = smul.u32 2, %s22
          %p215 = scmp.lt.s32.totalorder %s21, 1
          %s216 = scalar_select %p215, %s21, 1
          %p217 = scmp.lt.s32.totalorder %s214, 1
          %s218 = scalar_select %p217, %s214, 1
          %s219 = smul.addr %s216, 2
          %s220 = sadd.s32 %s218, %s219
          %s221 = smul.addr %s220, 8
          %s222 = scalar_lea.vmem %s1, %s221
          %s223 = smul.u32 2, %s22
        $region32: #{tpu_custom_call.1} parent=23 // pred_fallthru
          _
        // Predicated region
        $region33: #{tpu_custom_call.1} parent=23 // pred_check
          %p224 = pneg %p102
        $region34: #{tpu_custom_call.1} parent=23 // pred_check_branch
          %226 = sbr.rel (%p224) target = $region36
        $region35: #{tpu_custom_call.1} parent=23 // pred_region
          %s227 = smul.u32 2, %s22
          %p228 = scmp.lt.s32.totalorder %s21, 1
          %s229 = scalar_select %p228, %s21, 1
          %p230 = scmp.lt.s32.totalorder %s227, 1
          %s231 = scalar_select %p230, %s227, 1
          %s232 = smul.addr %s229, 2
          %s233 = sadd.s32 %s231, %s232
          %s234 = smul.addr %s233, 2
          %s235 = scalar_lea.vmem %s2, %s234
          %s236 = smul.u32 2, %s22
        $region36: #{tpu_custom_call.1} parent=23 // pred_fallthru
          _
      $region24: #{tpu_custom_call.1} parent=5 // pred_fallthru
        _
      %p237 = scmp.le.s32.totalorder 1, %s14
      %p238 = scmp.lt.s32.totalorder %s14, 3
      %p239 = pnand %p237, %p238
      %p240 = pneg %p239
      // Predicated region
      $region37: #{tpu_custom_call.1} parent=5 // pred_check
        _
      $region38: #{tpu_custom_call.1} parent=5 // pred_check_branch
        %242 = sbr.rel (%p239) target = $region40
      $region39: #{tpu_custom_call.1} parent=5 // pred_region
        %s243 = ssub.s32 %s14, 1
        %p244 = scmp.lt.s32.totalorder %s23, 1
        %s245 = scalar_select %p244, %s23, 1
        %s246 = smul.addr %s245, 2
        %s247 = smul.addr %s246, 8
        %s248 = scalar_lea.vmem %s0, %s247
        %p249 = pneg %p52
        %p250 = pneg %p49
        %s251 = smul.u32 2, %s24
        %p252 = scmp.lt.s32.totalorder %s23, 1
        %s253 = scalar_select %p252, %s23, 1
        %p254 = scmp.lt.s32.totalorder %s251, 1
        %s255 = scalar_select %p254, %s251, 1
        %s256 = smul.addr %s253, 2
        %s257 = sadd.s32 %s255, %s256
        %s258 = smul.addr %s257, 8
        %s259 = scalar_lea.vmem %s1, %s258
        %p260 = pneg %p80
        %p261 = pneg %p77
        %s262 = smul.u32 2, %s24
        %p263 = scmp.lt.s32.totalorder %s23, 1
        %s264 = scalar_select %p263, %s23, 1
        %p265 = scmp.lt.s32.totalorder %s262, 1
        %s266 = scalar_select %p265, %s262, 1
        %s267 = smul.addr %s264, 2
        %s268 = sadd.s32 %s266, %s267
        %s269 = smul.addr %s268, 2
        %s270 = scalar_lea.vmem %s2, %s269
        %p271 = pneg %p108
        %p272 = pneg %p105
        %p273 = pneg %p129
        %p274 = pneg %p126
        %p275 = pneg %p150
        %p276 = pneg %p147
        %p277 = pneg %p178
        %p278 = pneg %p175
        %s279 = sand.u32 %s165, 1
        %s280 = scalar_lea.sflag [#allocation3], %s279
        %s281 = sand.u32 %s165, 1
        %s282 = smul.addr %s281, 16
        %s283 = scalar_lea.vmem [#allocation2], %s282
        %p284 = scmp.lt.s32.totalorder %s23, 1
        %s285 = scalar_select %p284, %s23, 1
        %s286 = smul.addr %s285, 2
        %s287 = smul.addr %s286, 8
        %s288 = scalar_lea.vmem %s0, %s287
        %s289 = smul.u32 2, %s24
        %p290 = scmp.lt.s32.totalorder %s23, 1
        %s291 = scalar_select %p290, %s23, 1
        %p292 = scmp.lt.s32.totalorder %s289, 1
        %s293 = scalar_select %p292, %s289, 1
        %s294 = smul.addr %s291, 2
        %s295 = sadd.s32 %s293, %s294
        %s296 = smul.addr %s295, 8
        %s297 = scalar_lea.vmem %s1, %s296
        %s298 = smul.u32 2, %s24
        %s299 = smul.u32 2, %s24
        %p300 = scmp.lt.s32.totalorder %s23, 1
        %s301 = scalar_select %p300, %s23, 1
        %p302 = scmp.lt.s32.totalorder %s299, 1
        %s303 = scalar_select %p302, %s299, 1
        %s304 = smul.addr %s301, 2
        %s305 = sadd.s32 %s303, %s304
        %s306 = smul.addr %s305, 2
        %s307 = scalar_lea.vmem %s2, %s306
        %s308 = smul.u32 2, %s24
        %s309 = smul.u32 2, %s24
        %v310 = vld [vmem:[%s288] sm:$0xff]
        %v311 = vld [vmem:[%s288 + $0x8] sm:$0xff]
        %v312 = vld [vmem:[%s297] sm:$0xff]
        %v313 = vld [vmem:[%s297 + $0x8] sm:$0xff]
        %v314 = vld [vmem:[%s3] sm:$0xff]
        %v315 = vld [vmem:[%s4] sm:$0xf]
        %v316 = vld [vmem:[%s307] sm:$0x3]
        %v317 = vld [vmem:[%s307 + $0x2] sm:$0x3]
        %v318 = vunpack.c.0.s8 %v316
        %v319 = vunpack.c.0.s8 %v317
        %v320 = vcvt.s32.f32 %v318
        %v321 = vcvt.s32.f32 %v319
        %vm322 = vcmp.gt.f32.partialorder %v320, 0.0
        %vm323 = vcmp.gt.f32.partialorder %v321, 0.0
        %vm324 = vcmask 64512
        %v326 = vsel %vm324, %v310, 0
        %v329 = vsel %vm324, %v311, 0
        %331 = vmatprep.subr.mxu0 0.0
        %332 = vmatpush1.msra.mxu0 %v314
        %333 = vmatprep.subr.mxu0 0.0
        %334 = vmatpush1.msra.mxu0 0.0
        %335 = vmatprep.subr.mxu0 0.0
        %336 = vmatpush1.msra.mxu0 0.0
        %337 = vmatprep.subr.mxu0 0.0
        %338 = vmatpush1.msra.mxu0 0.0
        %339 = vmatprep.subr.mxu0 0.0
        %340 = vmatpush1.msra.mxu0 0.0
        %341 = vmatprep.subr.mxu0 0.0
        %342 = vmatpush1.msra.mxu0 0.0
        %343 = vmatprep.subr.mxu0 0.0
        %344 = vmatpush1.msra.mxu0 0.0
        %345 = vmatprep.subr.mxu0 0.0
        %346 = vmatpush1.msra.mxu0 0.0
        %347 = vmatprep.subr.mxu0 0.0
        %348 = vmatpush1.msra.mxu0 0.0
        %349 = vmatprep.subr.mxu0 0.0
        %350 = vmatpush1.msra.mxu0 0.0
        %351 = vmatprep.subr.mxu0 0.0
        %352 = vmatpush1.msra.mxu0 0.0
        %353 = vmatprep.subr.mxu0 0.0
        %354 = vmatpush1.msra.mxu0 0.0
        %355 = vmatprep.subr.mxu0 0.0
        %356 = vmatpush1.msra.mxu0 0.0
        %357 = vmatprep.subr.mxu0 0.0
        %358 = vmatpush1.msra.mxu0 0.0
        %359 = vmatprep.subr.mxu0 0.0
        %360 = vmatpush1.msra.mxu0 0.0
        %361 = vmatprep.subr.mxu0 0.0
        %362 = vmatpush1.msra.mxu0 0.0
        %363 = vmatprep.subr.mxu0 0.0
        %364 = vmatpush1.msra.mxu0 0.0
        %365 = vmatprep.subr.mxu0 0.0
        %366 = vmatpush1.msra.mxu0 0.0
        %367 = vmatprep.subr.mxu0 0.0
        %368 = vmatpush1.msra.mxu0 0.0
        %369 = vmatprep.subr.mxu0 0.0
        %370 = vmatpush1.msra.mxu0 0.0
        %371 = vmatprep.subr.mxu0 0.0
        %372 = vmatpush1.msra.mxu0 0.0
        %373 = vmatprep.subr.mxu0 0.0
        %374 = vmatpush1.msra.mxu0 0.0
        %375 = vmatprep.subr.mxu0 0.0
        %376 = vmatpush1.msra.mxu0 0.0
        %377 = vmatprep.subr.mxu0 0.0
        %378 = vmatpush1.msra.mxu0 0.0
        %379 = vmatprep.subr.mxu0 0.0
        %380 = vmatpush1.msra.mxu0 0.0
        %381 = vmatprep.subr.mxu0 0.0
        %382 = vmatpush1.msra.mxu0 0.0
        %383 = vmatprep.subr.mxu0 0.0
        %384 = vmatpush1.msra.mxu0 0.0
        %385 = vmatprep.subr.mxu0 0.0
        %386 = vmatpush1.msra.mxu0 0.0
        %387 = vmatprep.subr.mxu0 0.0
        %388 = vmatpush1.msra.mxu0 0.0
        %389 = vmatprep.subr.mxu0 0.0
        %390 = vmatpush1.msra.mxu0 0.0
        %391 = vmatprep.subr.mxu0 0.0
        %392 = vmatpush1.msra.mxu0 0.0
        %393 = vmatprep.subr.mxu0 0.0
        %394 = vmatpush1.msra.mxu0 0.0
        %395 = vmatprep.mubr.f32.mxu0 0.0
        %396 = vmatmul.mubr.f32.gmra.mrb[0].mxu0 %v326
        %v397 = vpop.f32.mrb[0].mxu0
        %v398 = vadd.f32 0.0, %v397
        %v399 = vpop.f32.mrb[0].mxu0
        %400 = vmatprep.mubr.f32.mxu0 0.0
        %401 = vmatmul.mubr.f32.gmra.mrb[0].mxu0 %v329
        %v402 = vpop.f32.mrb[0].mxu0
        %v403 = vadd.f32 0.0, %v402
        %v404 = vpop.f32.mrb[0].mxu0
        %405 = vdwg.mxu0
        %v407 = vsel %vm324, %v312, 0
        %v410 = vsel %vm324, %v313, 0
        %412 = vmatprep.subr.mxu0 0.0
        %413 = vmatpush1.msra.mxu0 %v314
        %414 = vmatprep.subr.mxu0 0.0
        %415 = vmatpush1.msra.mxu0 0.0
        %416 = vmatprep.subr.mxu0 0.0
        %417 = vmatpush1.msra.mxu0 0.0
        %418 = vmatprep.subr.mxu0 0.0
        %419 = vmatpush1.msra.mxu0 0.0
        %420 = vmatprep.subr.mxu0 0.0
        %421 = vmatpush1.msra.mxu0 0.0
        %422 = vmatprep.subr.mxu0 0.0
        %423 = vmatpush1.msra.mxu0 0.0
        %424 = vmatprep.subr.mxu0 0.0
        %425 = vmatpush1.msra.mxu0 0.0
        %426 = vmatprep.subr.mxu0 0.0
        %427 = vmatpush1.msra.mxu0 0.0
        %428 = vmatprep.subr.mxu0 0.0
        %429 = vmatpush1.msra.mxu0 0.0
        %430 = vmatprep.subr.mxu0 0.0
        %431 = vmatpush1.msra.mxu0 0.0
        %432 = vmatprep.subr.mxu0 0.0
        %433 = vmatpush1.msra.mxu0 0.0
        %434 = vmatprep.subr.mxu0 0.0
        %435 = vmatpush1.msra.mxu0 0.0
        %436 = vmatprep.subr.mxu0 0.0
        %437 = vmatpush1.msra.mxu0 0.0
        %438 = vmatprep.subr.mxu0 0.0
        %439 = vmatpush1.msra.mxu0 0.0
        %440 = vmatprep.subr.mxu0 0.0
        %441 = vmatpush1.msra.mxu0 0.0
        %442 = vmatprep.subr.mxu0 0.0
        %443 = vmatpush1.msra.mxu0 0.0
        %444 = vmatprep.subr.mxu0 0.0
        %445 = vmatpush1.msra.mxu0 0.0
        %446 = vmatprep.subr.mxu0 0.0
        %447 = vmatpush1.msra.mxu0 0.0
        %448 = vmatprep.subr.mxu0 0.0
        %449 = vmatpush1.msra.mxu0 0.0
        %450 = vmatprep.subr.mxu0 0.0
        %451 = vmatpush1.msra.mxu0 0.0
        %452 = vmatprep.subr.mxu0 0.0
        %453 = vmatpush1.msra.mxu0 0.0
        %454 = vmatprep.subr.mxu0 0.0
        %455 = vmatpush1.msra.mxu0 0.0
        %456 = vmatprep.subr.mxu0 0.0
        %457 = vmatpush1.msra.mxu0 0.0
        %458 = vmatprep.subr.mxu0 0.0
        %459 = vmatpush1.msra.mxu0 0.0
        %460 = vmatprep.subr.mxu0 0.0
        %461 = vmatpush1.msra.mxu0 0.0
        %462 = vmatprep.subr.mxu0 0.0
        %463 = vmatpush1.msra.mxu0 0.0
        %464 = vmatprep.subr.mxu0 0.0
        %465 = vmatpush1.msra.mxu0 0.0
        %466 = vmatprep.subr.mxu0 0.0
        %467 = vmatpush1.msra.mxu0 0.0
        %468 = vmatprep.subr.mxu0 0.0
        %469 = vmatpush1.msra.mxu0 0.0
        %470 = vmatprep.subr.mxu0 0.0
        %471 = vmatpush1.msra.mxu0 0.0
        %472 = vmatprep.subr.mxu0 0.0
        %473 = vmatpush1.msra.mxu0 0.0
        %474 = vmatprep.subr.mxu0 0.0
        %475 = vmatpush1.msra.mxu0 0.0
        %476 = vmatprep.mubr.f32.mxu0 0.0
        %477 = vmatmul.mubr.f32.gmra.mrb[0].mxu0 %v407
        %v478 = vpop.f32.mrb[0].mxu0
        %v479 = vadd.f32 0.0, %v478
        %v480 = vpop.f32.mrb[0].mxu0
        %481 = vmatprep.mubr.f32.mxu0 0.0
        %482 = vmatmul.mubr.f32.gmra.mrb[0].mxu0 %v410
        %v483 = vpop.f32.mrb[0].mxu0
        %v484 = vadd.f32 0.0, %v483
        %v485 = vpop.f32.mrb[0].mxu0
        %486 = vdwg.mxu0
        %v487 = vlaneseq
        %v488 = vshrl.u32 %v487, 7
        %v489 = vsub.s32 0, %v488
        %v490 = vrot.slane %v315, %v489
        %v491 = vmul.f32 %v479, %v490
        %v492 = vmul.f32 %v484, %v490
        %v493 = vsel %vm324, %v491, 0.0
        %494 = vadd.xlane.f32.xlu0 %v493
        %v495 = vpop.xlane.xlu0 %494
        %v496 = vsel %vm324, %v492, 0.0
        %497 = vadd.xlane.f32.xlu0 %v496
        %v498 = vpop.xlane.xlu0 %497
        %v499 = vlaneseq
        %v500 = vshrl.u32 %v499, 7
        %v501 = vsub.s32 1, %v500
        %v502 = vrot.slane %v315, %v501
        %v503 = vmul.f32 %v398, %v502
        %v504 = vmul.f32 %v403, %v502
        %v505 = vsel %vm324, %v503, 0.0
        %506 = vadd.xlane.f32.xlu0 %v505
        %v507 = vpop.xlane.xlu0 %506
        %v508 = vsel %vm324, %v504, 0.0
        %509 = vadd.xlane.f32.xlu0 %v508
        %v510 = vpop.xlane.xlu0 %509
        %511 = vxpose.xlu0.b32.start [1/16] %v507, 128
        %512 = vxpose.xlu0.b32.cont [2/16] %v510, 128
        %513 = vxpose.xlu0.b32.cont [3/16] 0.0, 128
        %514 = vxpose.xlu0.b32.cont [4/16] 0.0, 128
        %515 = vxpose.xlu0.b32.cont [5/16] 0.0, 128
        %516 = vxpose.xlu0.b32.cont [6/16] 0.0, 128
        %517 = vxpose.xlu0.b32.cont [7/16] 0.0, 128
        %518 = vxpose.xlu0.b32.cont [8/16] 0.0, 128
        %519 = vxpose.xlu0.b32.cont [9/16] 0.0, 128
        %520 = vxpose.xlu0.b32.cont [10/16] 0.0, 128
        %521 = vxpose.xlu0.b32.cont [11/16] 0.0, 128
        %522 = vxpose.xlu0.b32.cont [12/16] 0.0, 128
        %523 = vxpose.xlu0.b32.cont [13/16] 0.0, 128
        %524 = vxpose.xlu0.b32.cont [14/16] 0.0, 128
        %525 = vxpose.xlu0.b32.cont [15/16] 0.0, 128
        %526 = vxpose.xlu0.b32.end [16/16] 0.0, 128
        %v527 = vpop.trf.xlu0
        %v528 = vpop.trf.xlu0
        %v529 = vpop.trf.xlu0
        %v530 = vpop.trf.xlu0
        %v531 = vpop.trf.xlu0
        %v532 = vpop.trf.xlu0
        %v533 = vpop.trf.xlu0
        %v534 = vpop.trf.xlu0
        %v535 = vpop.trf.xlu0
        %v536 = vpop.trf.xlu0
        %v537 = vpop.trf.xlu0
        %v538 = vpop.trf.xlu0
        %v539 = vpop.trf.xlu0
        %v540 = vpop.trf.xlu0
        %v541 = vpop.trf.xlu0
        %v542 = vpop.trf.xlu0
        %v543 = vlaneseq
        %v544 = vshrl.u32 %v543, 7
        %v545 = vsub.s32 0, %v544
        %v546 = vrot.slane %v527, %v545
        %v547 = vadd.f32 %v495, %v546
        %v548 = vadd.f32 %v498, %v546
        %vm549 = vcmp.gt.f32.partialorder %v547, 0.0
        %vm550 = vcmp.gt.f32.partialorder %v548, 0.0
        %v551 = vmul.f32 %v547, 0.2
        %v552 = vmul.f32 %v548, 0.2
        %v553 = vsel %vm549, %v547, %v551
        %v554 = vsel %vm550, %v548, %v552
        %v555 = vsel %vm322, %v553, -9e+15
        %v556 = vsel %vm323, %v554, -9e+15
        %vm557 = vcmask 130048
        %v558 = vsel %vm557, %v555, -inf
        %559 = vmax.xlane.f32.xlu0 %v558
        %v560 = vpop.xlane.xlu0 %559
        %v561 = vsel %vm557, %v556, -inf
        %562 = vmax.xlane.f32.xlu0 %v561
        %v563 = vpop.xlane.xlu0 %562
        %v564 = vsub.f32 %v553, %v560
        %v565 = vsub.f32 %v554, %v563
        %v566 = vmul.f32 %v564, 1.442695
        %v567 = vpow.pop %v566
        %v568 = vmul.f32 %v565, 1.442695
        %v569 = vpow.pop %v568
        %v570 = vsel %vm322, %v567, 0.0
        %v571 = vsel %vm323, %v569, 0.0
        %v572 = vsel %vm557, %v570, 0.0
        %573 = vadd.xlane.f32.xlu0 %v572
        %v574 = vpop.xlane.xlu0 %573
        %v575 = vsel %vm557, %v571, 0.0
        %576 = vadd.xlane.f32.xlu0 %v575
        %v577 = vpop.xlane.xlu0 %576
        %vm578 = vcmp.gt.f32.partialorder %v574, 0.0
        %vm579 = vcmp.gt.f32.partialorder %v577, 0.0
        %v580 = vsel %vm578, 1, 0
        %v581 = vsel %vm579, 1, 0
        %vm582 = vcmp.eq.s32.totalorder %v580, 1
        %vm583 = vcmp.eq.s32.totalorder %v581, 1
        %v584 = vsel %vm582, %v570, 1.0
        %v585 = vsel %vm583, %v571, 1.0
        %v586 = vsel %vm578, %v574, 16.0
        %v587 = vsel %vm579, %v577, 16.0
        %v588 = vrcp.pop %v586
        %v589 = vrcp.pop %v587
        %v590 = vmul.f32 %v584, %v588
        %v591 = vmul.f32 %v585, %v589
        %v593 = vsel %vm557, %v590, 0
        %v596 = vsel %vm557, %v591, 0
        %598 = vmatprep.subr.mxu0 0.0
        %599 = vmatpush1.msra.mxu0 %v398
        %600 = vmatprep.subr.mxu0 0.0
        %601 = vmatpush1.msra.mxu0 %v403
        %602 = vmatprep.subr.mxu0 0.0
        %603 = vmatpush1.msra.mxu0 0.0
        %604 = vmatprep.subr.mxu0 0.0
        %605 = vmatpush1.msra.mxu0 0.0
        %606 = vmatprep.subr.mxu0 0.0
        %607 = vmatpush1.msra.mxu0 0.0
        %608 = vmatprep.subr.mxu0 0.0
        %609 = vmatpush1.msra.mxu0 0.0
        %610 = vmatprep.subr.mxu0 0.0
        %611 = vmatpush1.msra.mxu0 0.0
        %612 = vmatprep.subr.mxu0 0.0
        %613 = vmatpush1.msra.mxu0 0.0
        %614 = vmatprep.subr.mxu0 0.0
        %615 = vmatpush1.msra.mxu0 0.0
        %616 = vmatprep.subr.mxu0 0.0
        %617 = vmatpush1.msra.mxu0 0.0
        %618 = vmatprep.subr.mxu0 0.0
        %619 = vmatpush1.msra.mxu0 0.0
        %620 = vmatprep.subr.mxu0 0.0
        %621 = vmatpush1.msra.mxu0 0.0
        %622 = vmatprep.subr.mxu0 0.0
        %623 = vmatpush1.msra.mxu0 0.0
        %624 = vmatprep.subr.mxu0 0.0
        %625 = vmatpush1.msra.mxu0 0.0
        %626 = vmatprep.subr.mxu0 0.0
        %627 = vmatpush1.msra.mxu0 0.0
        %628 = vmatprep.subr.mxu0 0.0
        %629 = vmatpush1.msra.mxu0 0.0
        %630 = vmatprep.subr.mxu0 0.0
        %631 = vmatpush1.msra.mxu0 0.0
        %632 = vmatprep.subr.mxu0 0.0
        %633 = vmatpush1.msra.mxu0 0.0
        %634 = vmatprep.subr.mxu0 0.0
        %635 = vmatpush1.msra.mxu0 0.0
        %636 = vmatprep.subr.mxu0 0.0
        %637 = vmatpush1.msra.mxu0 0.0
        %638 = vmatprep.subr.mxu0 0.0
        %639 = vmatpush1.msra.mxu0 0.0
        %640 = vmatprep.subr.mxu0 0.0
        %641 = vmatpush1.msra.mxu0 0.0
        %642 = vmatprep.subr.mxu0 0.0
        %643 = vmatpush1.msra.mxu0 0.0
        %644 = vmatprep.subr.mxu0 0.0
        %645 = vmatpush1.msra.mxu0 0.0
        %646 = vmatprep.subr.mxu0 0.0
        %647 = vmatpush1.msra.mxu0 0.0
        %648 = vmatprep.subr.mxu0 0.0
        %649 = vmatpush1.msra.mxu0 0.0
        %650 = vmatprep.subr.mxu0 0.0
        %651 = vmatpush1.msra.mxu0 0.0
        %652 = vmatprep.subr.mxu0 0.0
        %653 = vmatpush1.msra.mxu0 0.0
        %654 = vmatprep.subr.mxu0 0.0
        %655 = vmatpush1.msra.mxu0 0.0
        %656 = vmatprep.subr.mxu0 0.0
        %657 = vmatpush1.msra.mxu0 0.0
        %658 = vmatprep.subr.mxu0 0.0
        %659 = vmatpush1.msra.mxu0 0.0
        %660 = vmatprep.subr.mxu0 0.0
        %661 = vmatpush1.msra.mxu0 0.0
        %662 = vmatprep.mubr.f32.mxu0 0.0
        %663 = vmatmul.mubr.f32.gmra.mrb[0].mxu0 %v593
        %v664 = vpop.f32.mrb[0].mxu0
        %v665 = vadd.f32 0.0, %v664
        %v666 = vpop.f32.mrb[0].mxu0
        %667 = vmatprep.mubr.f32.mxu0 0.0
        %668 = vmatmul.mubr.f32.gmra.mrb[0].mxu0 %v596
        %v669 = vpop.f32.mrb[0].mxu0
        %v670 = vadd.f32 0.0, %v669
        %v671 = vpop.f32.mrb[0].mxu0
        %672 = vdwg.mxu0
        %vm673 = vcmp.gt.f32.partialorder %v665, 0.0
        %vm674 = vcmp.gt.f32.partialorder %v670, 0.0
        %v675 = vmul.f32 %v665, 1.442695
        %v676 = vpow.pop %v675
        %v677 = vmul.f32 %v670, 1.442695
        %v678 = vpow.pop %v677
        %v679 = vsub.f32 %v676, 1.0
        %v680 = vsub.f32 %v678, 1.0
        %v681 = vsel %vm673, %v665, %v679
        %v682 = vsel %vm674, %v670, %v680
        %v683 = vlaneseq
        %v684 = vshrl.u32 %v683, 7
        %v685 = vsub.s32 2, %v684
        %v686 = vrot.slane %v315, %v685
        %688 = vrot.lane.b32.xlu0 %v686, 8
        %v689 = vpop.permute.xlu0 %688
        %v691 = vmul.f32 %v479, %v689
        %v692 = vmul.f32 %v484, %v689
        %695 = vrot.lane.b32.xlu0 %v691, 120
        %v696 = vpop.permute.xlu0 %695
        %697 = vrot.lane.b32.xlu0 %v692, 120
        %v698 = vpop.permute.xlu0 %697
        %v701 = vsel %vm324, %v696, 0.0
        %702 = vadd.xlane.f32.xlu0 %v701
        %v703 = vpop.xlane.xlu0 %702
        %v704 = vsel %vm324, %v698, 0.0
        %705 = vadd.xlane.f32.xlu0 %v704
        %v706 = vpop.xlane.xlu0 %705
        %v707 = vlaneseq
        %v708 = vshrl.u32 %v707, 7
        %v709 = vsub.s32 3, %v708
        %v710 = vrot.slane %v315, %v709
        %712 = vrot.lane.b32.xlu0 %v710, 8
        %v713 = vpop.permute.xlu0 %712
        %v715 = vmul.f32 %v398, %v713
        %v716 = vmul.f32 %v403, %v713
        %719 = vrot.lane.b32.xlu0 %v715, 120
        %v720 = vpop.permute.xlu0 %719
        %721 = vrot.lane.b32.xlu0 %v716, 120
        %v722 = vpop.permute.xlu0 %721
        %v725 = vsel %vm324, %v720, 0.0
        %726 = vadd.xlane.f32.xlu0 %v725
        %v727 = vpop.xlane.xlu0 %726
        %v728 = vsel %vm324, %v722, 0.0
        %729 = vadd.xlane.f32.xlu0 %v728
        %v730 = vpop.xlane.xlu0 %729
        %731 = vxpose.xlu0.b32.start [1/16] %v727, 128
        %732 = vxpose.xlu0.b32.cont [2/16] %v730, 128
        %733 = vxpose.xlu0.b32.cont [3/16] 0.0, 128
        %734 = vxpose.xlu0.b32.cont [4/16] 0.0, 128
        %735 = vxpose.xlu0.b32.cont [5/16] 0.0, 128
        %736 = vxpose.xlu0.b32.cont [6/16] 0.0, 128
        %737 = vxpose.xlu0.b32.cont [7/16] 0.0, 128
        %738 = vxpose.xlu0.b32.cont [8/16] 0.0, 128
        %739 = vxpose.xlu0.b32.cont [9/16] 0.0, 128
        %740 = vxpose.xlu0.b32.cont [10/16] 0.0, 128
        %741 = vxpose.xlu0.b32.cont [11/16] 0.0, 128
        %742 = vxpose.xlu0.b32.cont [12/16] 0.0, 128
        %743 = vxpose.xlu0.b32.cont [13/16] 0.0, 128
        %744 = vxpose.xlu0.b32.cont [14/16] 0.0, 128
        %745 = vxpose.xlu0.b32.cont [15/16] 0.0, 128
        %746 = vxpose.xlu0.b32.end [16/16] 0.0, 128
        %v747 = vpop.trf.xlu0
        %v748 = vpop.trf.xlu0
        %v749 = vpop.trf.xlu0
        %v750 = vpop.trf.xlu0
        %v751 = vpop.trf.xlu0
        %v752 = vpop.trf.xlu0
        %v753 = vpop.trf.xlu0
        %v754 = vpop.trf.xlu0
        %v755 = vpop.trf.xlu0
        %v756 = vpop.trf.xlu0
        %v757 = vpop.trf.xlu0
        %v758 = vpop.trf.xlu0
        %v759 = vpop.trf.xlu0
        %v760 = vpop.trf.xlu0
        %v761 = vpop.trf.xlu0
        %v762 = vpop.trf.xlu0
        %v763 = vlaneseq
        %v764 = vshrl.u32 %v763, 7
        %v765 = vsub.s32 0, %v764
        %v766 = vrot.slane %v747, %v765
        %v767 = vadd.f32 %v703, %v766
        %v768 = vadd.f32 %v706, %v766
        %vm769 = vcmp.gt.f32.partialorder %v767, 0.0
        %vm770 = vcmp.gt.f32.partialorder %v768, 0.0
        %v771 = vmul.f32 %v767, 0.2
        %v772 = vmul.f32 %v768, 0.2
        %v773 = vsel %vm769, %v767, %v771
        %v774 = vsel %vm770, %v768, %v772
        %v775 = vsel %vm322, %v773, -9e+15
        %v776 = vsel %vm323, %v774, -9e+15
        %v777 = vsel %vm557, %v775, -inf
        %778 = vmax.xlane.f32.xlu0 %v777
        %v779 = vpop.xlane.xlu0 %778
        %v780 = vsel %vm557, %v776, -inf
        %781 = vmax.xlane.f32.xlu0 %v780
        %v782 = vpop.xlane.xlu0 %781
        %v783 = vsub.f32 %v773, %v779
        %v784 = vsub.f32 %v774, %v782
        %v785 = vmul.f32 %v783, 1.442695
        %v786 = vpow.pop %v785
        %v787 = vmul.f32 %v784, 1.442695
        %v788 = vpow.pop %v787
        %v789 = vsel %vm322, %v786, 0.0
        %v790 = vsel %vm323, %v788, 0.0
        %v791 = vsel %vm557, %v789, 0.0
        %792 = vadd.xlane.f32.xlu0 %v791
        %v793 = vpop.xlane.xlu0 %792
        %v794 = vsel %vm557, %v790, 0.0
        %795 = vadd.xlane.f32.xlu0 %v794
        %v796 = vpop.xlane.xlu0 %795
        %vm797 = vcmp.gt.f32.partialorder %v793, 0.0
        %vm798 = vcmp.gt.f32.partialorder %v796, 0.0
        %v799 = vsel %vm797, 1, 0
        %v800 = vsel %vm798, 1, 0
        %vm801 = vcmp.eq.s32.totalorder %v799, 1
        %vm802 = vcmp.eq.s32.totalorder %v800, 1
        %v803 = vsel %vm801, %v789, 1.0
        %v804 = vsel %vm802, %v790, 1.0
        %v805 = vsel %vm797, %v793, 16.0
        %v806 = vsel %vm798, %v796, 16.0
        %v807 = vrcp.pop %v805
        %v808 = vrcp.pop %v806
        %v809 = vmul.f32 %v803, %v807
        %v810 = vmul.f32 %v804, %v808
        %813 = vrot.lane.b32.xlu0 %v398, 120
        %v814 = vpop.permute.xlu0 %813
        %815 = vrot.lane.b32.xlu0 %v403, 120
        %v816 = vpop.permute.xlu0 %815
        %v820 = vsel %vm557, %v809, 0
        %v823 = vsel %vm557, %v810, 0
        %825 = vmatprep.subr.mxu0 0.0
        %826 = vmatpush1.msra.mxu0 %v814
        %827 = vmatprep.subr.mxu0 0.0
        %828 = vmatpush1.msra.mxu0 %v816
        %829 = vmatprep.subr.mxu0 0.0
        %830 = vmatpush1.msra.mxu0 0.0
        %831 = vmatprep.subr.mxu0 0.0
        %832 = vmatpush1.msra.mxu0 0.0
        %833 = vmatprep.subr.mxu0 0.0
        %834 = vmatpush1.msra.mxu0 0.0
        %835 = vmatprep.subr.mxu0 0.0
        %836 = vmatpush1.msra.mxu0 0.0
        %837 = vmatprep.subr.mxu0 0.0
        %838 = vmatpush1.msra.mxu0 0.0
        %839 = vmatprep.subr.mxu0 0.0
        %840 = vmatpush1.msra.mxu0 0.0
        %841 = vmatprep.subr.mxu0 0.0
        %842 = vmatpush1.msra.mxu0 0.0
        %843 = vmatprep.subr.mxu0 0.0
        %844 = vmatpush1.msra.mxu0 0.0
        %845 = vmatprep.subr.mxu0 0.0
        %846 = vmatpush1.msra.mxu0 0.0
        %847 = vmatprep.subr.mxu0 0.0
        %848 = vmatpush1.msra.mxu0 0.0
        %849 = vmatprep.subr.mxu0 0.0
        %850 = vmatpush1.msra.mxu0 0.0
        %851 = vmatprep.subr.mxu0 0.0
        %852 = vmatpush1.msra.mxu0 0.0
        %853 = vmatprep.subr.mxu0 0.0
        %854 = vmatpush1.msra.mxu0 0.0
        %855 = vmatprep.subr.mxu0 0.0
        %856 = vmatpush1.msra.mxu0 0.0
        %857 = vmatprep.subr.mxu0 0.0
        %858 = vmatpush1.msra.mxu0 0.0
        %859 = vmatprep.subr.mxu0 0.0
        %860 = vmatpush1.msra.mxu0 0.0
        %861 = vmatprep.subr.mxu0 0.0
        %862 = vmatpush1.msra.mxu0 0.0
        %863 = vmatprep.subr.mxu0 0.0
        %864 = vmatpush1.msra.mxu0 0.0
        %865 = vmatprep.subr.mxu0 0.0
        %866 = vmatpush1.msra.mxu0 0.0
        %867 = vmatprep.subr.mxu0 0.0
        %868 = vmatpush1.msra.mxu0 0.0
        %869 = vmatprep.subr.mxu0 0.0
        %870 = vmatpush1.msra.mxu0 0.0
        %871 = vmatprep.subr.mxu0 0.0
        %872 = vmatpush1.msra.mxu0 0.0
        %873 = vmatprep.subr.mxu0 0.0
        %874 = vmatpush1.msra.mxu0 0.0
        %875 = vmatprep.subr.mxu0 0.0
        %876 = vmatpush1.msra.mxu0 0.0
        %877 = vmatprep.subr.mxu0 0.0
        %878 = vmatpush1.msra.mxu0 0.0
        %879 = vmatprep.subr.mxu0 0.0
        %880 = vmatpush1.msra.mxu0 0.0
        %881 = vmatprep.subr.mxu0 0.0
        %882 = vmatpush1.msra.mxu0 0.0
        %883 = vmatprep.subr.mxu0 0.0
        %884 = vmatpush1.msra.mxu0 0.0
        %885 = vmatprep.subr.mxu0 0.0
        %886 = vmatpush1.msra.mxu0 0.0
        %887 = vmatprep.subr.mxu0 0.0
        %888 = vmatpush1.msra.mxu0 0.0
        %889 = vmatprep.mubr.f32.mxu0 0.0
        %890 = vmatmul.mubr.f32.gmra.mrb[0].mxu0 %v820
        %v891 = vpop.f32.mrb[0].mxu0
        %v892 = vadd.f32 0.0, %v891
        %v893 = vpop.f32.mrb[0].mxu0
        %894 = vmatprep.mubr.f32.mxu0 0.0
        %895 = vmatmul.mubr.f32.gmra.mrb[0].mxu0 %v823
        %v896 = vpop.f32.mrb[0].mxu0
        %v897 = vadd.f32 0.0, %v896
        %v898 = vpop.f32.mrb[0].mxu0
        %899 = vdwg.mxu0
        %vm900 = vcmp.gt.f32.partialorder %v892, 0.0
        %vm901 = vcmp.gt.f32.partialorder %v897, 0.0
        %v902 = vmul.f32 %v892, 1.442695
        %v903 = vpow.pop %v902
        %v904 = vmul.f32 %v897, 1.442695
        %v905 = vpow.pop %v904
        %v906 = vsub.f32 %v903, 1.0
        %v907 = vsub.f32 %v905, 1.0
        %v908 = vsel %vm900, %v892, %v906
        %v909 = vsel %vm901, %v897, %v907
        %912 = vrot.lane.b32.xlu0 %v908, 8
        %v913 = vpop.permute.xlu0 %912
        %914 = vrot.lane.b32.xlu0 %v909, 8
        %v915 = vpop.permute.xlu0 %914
        %v918 = vsel %vm324, %v681, %v913
        %v919 = vsel %vm324, %v682, %v915
        %920 = vst.msk [vmem:[%s283] sm:$0xff] %vm557, %v918
        %921 = vst.msk [vmem:[%s283 + $0x8] sm:$0xff] %vm557, %v919
        %s922 = sand.u32 %s165, 1
        %s923 = scalar_lea.sflag [#allocation3], %s922
        %s924 = sand.u32 %s165, 1
        %s925 = smul.addr %s924, 16
        %s926 = scalar_lea.vmem [#allocation2], %s925
        // Predicated region
        $region41: #{tpu_custom_call.1} parent=39 // pred_check
          %p927 = pneg %p175
        $region42: #{tpu_custom_call.1} parent=39 // pred_check_branch
          %929 = sbr.rel (%p927) target = $region44
        $region43: #{tpu_custom_call.1} parent=39 // pred_region
          %s930 = smul.u32 2, %s24
          %s932 = ssub.s32 256, 256
          %933 = vsyncadd %s923, %s932
          %s934 = smul.addr %s23, 2
          %s935 = sadd.s32 %s930, %s934
          %s936 = smul.addr %s935, 128
          %s937 = scalar_lea.hbm %s5, %s936
          %s938 = sshll.u32 %s926, 4
          %s939 = int_to_ptr.vmem [resolvable:$true] %s938
          %944 = dma.vmem_to_hbm [thread:$0]  %s939, 256, %s937, %s923, 128, 128, 8
        $region44: #{tpu_custom_call.1} parent=39 // pred_fallthru
          _
      $region40: #{tpu_custom_call.1} parent=5 // pred_fallthru
        _
      %p945 = scmp.le.s32.totalorder 2, %s14
      // Predicated region
      $region45: #{tpu_custom_call.1} parent=5 // pred_check
        %p946 = pneg %p945
      $region46: #{tpu_custom_call.1} parent=5 // pred_check_branch
        %948 = sbr.rel (%p946) target = $region48
      $region47: #{tpu_custom_call.1} parent=5 // pred_region
        %s949 = ssub.s32 %s14, 2
        // Predicated region
        $region49: #{tpu_custom_call.1} parent=47 // pred_check
          %p950 = pneg %p181
        $region50: #{tpu_custom_call.1} parent=47 // pred_check_branch
          %952 = sbr.rel (%p950) target = $region52
        $region51: #{tpu_custom_call.1} parent=47 // pred_region
          %s953 = sand.u32 %s166, 1
          %s954 = scalar_lea.sflag [#allocation3], %s953
          %s955 = sand.u32 %s166, 1
          %s956 = smul.addr %s955, 16
          %s957 = scalar_lea.vmem [#allocation2], %s956
          %958 = dma.done %s954, 256
        $region52: #{tpu_custom_call.1} parent=47 // pred_fallthru
          _
      $region48: #{tpu_custom_call.1} parent=5 // pred_fallthru
        _
    $region6: #{tpu_custom_call.1} parent=1 // loop_footer
      %s18 = sadd.s32 1, %s14
    $region7: #{tpu_custom_call.1} parent=1 // loop_footer_branch
      %13 = sbr.rel target = $region3
    $region8: #{tpu_custom_call.1} parent=1 // loop_exit
      _
    %959 = vsyncpa [#allocation3], 1
    %s960 = scalar_lea.sflag [#allocation3], 1
    %961 = vsyncpa %s960, 1

</llo_original>
